<compile_context>
chip_gen: v5e
topology: v5e:2x2
jax: 0.10.0
libtpu: 0.0.40
codegen_flags: <defaults>
</compile_context>

<pallas_src>
import functools
import math

import jax
import jax.numpy as jnp
from jax import lax
from jax.experimental import pallas as pl
from jax.experimental.pallas import tpu as pltpu

_EPS = 1e-5


def _round_up(x, m):
    return (x + m - 1) // m * m


def _physical_vmem_bytes():
    try:
        return int(pltpu.get_tpu_info().vmem_capacity_bytes)
    except Exception:
        return 64 * 2**20  # conservative (v7x per-TensorCore)


def _choose_tile_nl(nl, seq_len, bytes_per_col, phys_vmem):
    """Lane tile: multiple of 128 (lane-dense vst) and of L (roll-conv exact at
    tile edges, whole sequences per tile), sized against the VMEM budget."""
    unit = math.lcm(128, seq_len)
    total_units = -(-nl // unit)
    lane_target = 4096 if phys_vmem >= 96 * 2**20 else 2048
    by_target = max(1, lane_target // unit)
    budget = max(4 * 2**20, phys_vmem // 10)
    by_budget = max(1, budget // max(1, unit * bytes_per_col))
    return unit * max(1, min(total_units, by_target, by_budget))


def _vmem_limit(bytes_est, phys_vmem):
    cap = min(100 * 2**20, int(phys_vmem * 0.72))   # stay below physical VMEM
    want = int(bytes_est * 1.25) + (2 << 20)        # margin for Mosaic scratch
    return int(min(cap, max(16 * 2**20, want)))


# --------------------------- kernel bodies ----------------------------------


def _conv3_dots(a, mask_ref, w_ref, tile, mm_dtype):
    """Conv1d(k=3, stride=1, padding=1) as three accumulating MXU dots.

    a: (C, tile) float32 activations (already bn+relu'd).
    w_ref: (3, O, C) resident tap weights.
    mask rows zero the roll wrap-around at sequence boundaries (== zero
    padding); tile % L == 0 makes tile edges sequence boundaries too.
    """
    mf = mask_ref[0:1, :]                                                  # l != 0
    ml = mask_ref[1:2, :]                                                  # l != L-1
    a_prev = (pltpu.roll(a, shift=1, axis=1) * mf).astype(mm_dtype)        # x[l-1]
    a_mid = a.astype(mm_dtype)                                             # x[l]
    a_next = (pltpu.roll(a, shift=tile - 1, axis=1) * ml).astype(mm_dtype)  # x[l+1]
    out = jnp.dot(w_ref[0], a_prev, preferred_element_type=jnp.float32)
    out += jnp.dot(w_ref[1], a_mid, preferred_element_type=jnp.float32)
    out += jnp.dot(w_ref[2], a_next, preferred_element_type=jnp.float32)
    return out


def _bn1_conv1_kernel(x_ref, s1_ref, t1_ref, w1_ref, mask_ref,
                      h1_ref, sum_ref, ssq_ref, *, tile, nl_real, mm_dtype):
    i = pl.program_id(0)
    x = x_ref[...].astype(jnp.float32)
    a = jnp.maximum(x * s1_ref[...] + t1_ref[...], 0.0)          # bn1 + relu (f32)
    h1 = _conv3_dots(a, mask_ref, w1_ref, tile, mm_dtype)        # (planes_p, tile) f32
    h1_ref[...] = h1.astype(h1_ref.dtype)

    # bn2 partial statistics: per-tile outputs (grid axis stays "parallel").
    # Padded NL columns exist only on the last (partial) tile; mask only there.
    full = (i + 1) * tile <= nl_real

    @pl.when(full)
    def _():
        sum_ref[0] = jnp.sum(h1, axis=1, keepdims=True)
        ssq_ref[0] = jnp.sum(h1 * h1, axis=1, keepdims=True)

    @pl.when(jnp.logical_not(full))
    def _():
        col = lax.broadcasted_iota(jnp.int32, (1, tile), 1)
        valid = ((i * tile + col) < nl_real).astype(jnp.float32)
        hm = h1 * valid
        sum_ref[0] = jnp.sum(hm, axis=1, keepdims=True)
        ssq_ref[0] = jnp.sum(hm * hm, axis=1, keepdims=True)


def _bn2_conv2_kernel(h1_ref, x_ref, s2_ref, t2_ref, w2_ref, *rest,
                      tile, seq_len, mm_dtype, has_wsc, ncl_out):
    if has_wsc:
        wsc_ref, mask_ref, out_ref = rest
    else:
        mask_ref, out_ref = rest

    h = h1_ref[...].astype(jnp.float32)
    a = jnp.maximum(h * s2_ref[...] + t2_ref[...], 0.0)          # bn2 + relu (f32)
    out = _conv3_dots(a, mask_ref, w2_ref, tile, mm_dtype)
    if has_wsc:
        # 1x1 conv shortcut as one extra accumulating dot.
        out += jnp.dot(wsc_ref[...], x_ref[...], preferred_element_type=jnp.float32)
    else:
        # Identity shortcut (in_planes == planes): plain VPU add, no MXU work.
        out += x_ref[...].astype(jnp.float32)

    if ncl_out:
        # Store straight into (seq, planes_p, L) layout.  tile % L == 0 gives
        # whole sequences per tile, L % 128 == 0 makes every slice a
        # lane-aligned slab, so this is just tile//L plain stores and the XLA
        # de-pad/transpose epilogue disappears.
        for s in range(tile // seq_len):
            out_ref[s] = out[:, s * seq_len:(s + 1) * seq_len].astype(out_ref.dtype)
    else:
        out_ref[...] = out.astype(out_ref.dtype)


# ------------------------------ wrapper --------------------------------------


@functools.partial(jax.jit, static_argnames=("stride", "matmul_dtype", "out_dtype"))
def newblock2_forward(x, params, *, stride=1,
                      matmul_dtype=jnp.bfloat16, out_dtype=jnp.float32):
    """NewBlock2 forward (PyTorch training-mode BatchNorm semantics).

    x: (N, Cin, L) float32 (NCL).  Returns (N, planes, L) of `out_dtype`.

    matmul_dtype: storage/matmul dtype for activations and conv weights.
    bfloat16 (default) halves HBM traffic on every TPU generation (v5e/v6e/v7x
    MXUs take bf16 natively); BN statistics, normalization, ReLU and MXU
    accumulation are always float32.
    out_dtype: output dtype (float32 matches the PyTorch reference exactly;
    bfloat16 cuts the K2 output stream in half if the consumer tolerates it).
    """
    if stride != 1:
        raise NotImplementedError("TODO(synk): stride > 1 not implemented")
    n, cin, seq_len = x.shape
    planes = params["conv1_w"].shape[0]
    has_wsc = "shortcut_w" in params
    if not has_wsc and cin != planes:
        raise ValueError("identity shortcut requires in_planes == planes "
                         "(supply shortcut_w otherwise)")
    nl = n * seq_len

    act_bytes = jnp.dtype(matmul_dtype).itemsize
    out_bytes = jnp.dtype(out_dtype).itemsize
    sub = 16 if min(act_bytes, out_bytes) == 2 else 8   # bf16 packs 2 rows/sublane
    cin_p = _round_up(cin, sub)
    planes_p = _round_up(planes, sub)

    phys_vmem = _physical_vmem_bytes()
    per_col = (2 * (cin_p + planes_p) * act_bytes          # double-buffered streams
               + 2 * planes_p * out_bytes                  # double-buffered output
               + 4 * (cin_p + planes_p) * 4                # f32 temporaries
               + 3 * max(cin_p, planes_p) * act_bytes)     # mm-dtype tap copies
    tile = _choose_tile_nl(nl, seq_len, per_col, phys_vmem)
    nl_pad = _round_up(nl, tile)
    num_tiles = nl_pad // tile

    # Direct (seq, planes, L) output when every in-tile sequence slice is
    # lane-aligned; otherwise fall back to the flat layout + XLA epilogue.
    ncl_out = (seq_len % 128 == 0)
    seqs_per_tile = tile // seq_len
    n_seq_pad = nl_pad // seq_len

    # ---- glue (plain JAX): layout transform, bn1 stats, parameter packing ----
    xf = x.astype(jnp.float32)
    x2f = jnp.transpose(xf, (1, 0, 2)).reshape(cin, nl)
    # bn1 statistics in the same XLA region that builds x2 (single-pass biased
    # var E[x^2] - mean^2, eps = 1e-5, matching PyTorch train-mode forward).
    sum1 = jnp.sum(x2f, axis=1)
    ssq1 = jnp.sum(x2f * x2f, axis=1)
    x2 = jnp.pad(x2f, ((0, cin_p - cin), (0, nl_pad - nl))).astype(matmul_dtype)

    inv_n = 1.0 / float(nl)

    def bn_coeffs(s, q, g, b, c_pad):
        mean = s * inv_n
        var = jnp.maximum(q * inv_n - mean * mean, 0.0)   # biased, single pass
        scale = g * lax.rsqrt(var + _EPS)
        shift = b - mean * scale
        pad = c_pad - scale.shape[0]
        return (jnp.pad(scale, (0, pad)).reshape(c_pad, 1),
                jnp.pad(shift, (0, pad)).reshape(c_pad, 1))

    scale1, shift1 = bn_coeffs(sum1, ssq1,
                               params["bn1_g"].astype(jnp.float32),
                               params["bn1_b"].astype(jnp.float32), cin_p)

    # Conv weights as (3, O, C) tap slabs (per-tap accumulating dots in-kernel).
    def pack_taps(w, o_p, c_p):
        o, c, _ = w.shape
        wp = jnp.zeros((3, o_p, c_p), jnp.float32)
        return wp.at[:, :o, :c].set(jnp.transpose(w.astype(jnp.float32), (2, 0, 1)))

    w1p = pack_taps(params["conv1_w"], planes_p, cin_p).astype(matmul_dtype)
    w2p = pack_taps(params["conv2_w"], planes_p, planes_p).astype(matmul_dtype)
    if has_wsc:
        wsc = jnp.zeros((planes_p, cin_p), jnp.float32)
        wsc = wsc.at[:planes, :cin].set(
            params["shortcut_w"][:, :, 0].astype(jnp.float32))
        wsc = wsc.astype(matmul_dtype)

    # Sequence-boundary masks for the roll-based conv (tile % L == 0, so one
    # (2, tile) slab with a constant index_map serves every tile).
    l_idx = jnp.arange(tile, dtype=jnp.int32) % seq_len
    conv_mask = jnp.stack([(l_idx != 0).astype(jnp.float32),
                           (l_idx != seq_len - 1).astype(jnp.float32)], axis=0)

    col_spec_x = pl.BlockSpec((cin_p, tile), lambda i: (0, i))
    col_spec_h = pl.BlockSpec((planes_p, tile), lambda i: (0, i))

    def resident(shape):
        nd = len(shape)
        return pl.BlockSpec(shape, lambda i, _nd=nd: (0,) * _nd)

    stat_spec = pl.BlockSpec((1, planes_p, 1), lambda i: (i, 0, 0))

    # ---- K1: bn1 + relu + conv1 -> h1, plus per-tile bn2 partial statistics ----
    k1 = functools.partial(_bn1_conv1_kernel, tile=tile, nl_real=nl,
                           mm_dtype=matmul_dtype)
    k1_bytes = (2 * (cin_p + planes_p) * tile * act_bytes
                + (4 * cin_p + 2 * planes_p) * tile * 4
                + 3 * cin_p * tile * act_bytes
                + 3 * planes_p * cin_p * act_bytes + 2 * tile * 4)
    h1, psum2, pssq2 = pl.pallas_call(
        k1,
        out_shape=(jax.ShapeDtypeStruct((planes_p, nl_pad), matmul_dtype),
                   jax.ShapeDtypeStruct((num_tiles, planes_p, 1), jnp.float32),
                   jax.ShapeDtypeStruct((num_tiles, planes_p, 1), jnp.float32)),
        grid=(num_tiles,),
        in_specs=[col_spec_x,
                  resident((cin_p, 1)), resident((cin_p, 1)),
                  resident((3, planes_p, cin_p)),
                  resident((2, tile))],
        out_specs=(col_spec_h, stat_spec, stat_spec),
        compiler_params=pltpu.CompilerParams(
            dimension_semantics=("parallel",),       # per-tile stats -> megacore OK
            vmem_limit_bytes=_vmem_limit(k1_bytes, phys_vmem)),
        cost_estimate=pl.CostEstimate(
            flops=int(2 * planes_p * 3 * cin_p * nl_pad), transcendentals=0,
            bytes_accessed=int((cin_p + planes_p) * nl_pad * act_bytes)),
    )(x2, scale1, shift1, w1p, conv_mask)

    scale2, shift2 = bn_coeffs(jnp.sum(psum2, axis=0)[:planes, 0],
                               jnp.sum(pssq2, axis=0)[:planes, 0],
                               params["bn2_g"].astype(jnp.float32),
                               params["bn2_b"].astype(jnp.float32), planes_p)

    # ---- K2: bn2 + relu + conv2 + shortcut ----
    k2 = functools.partial(_bn2_conv2_kernel, tile=tile, seq_len=seq_len,
                           mm_dtype=matmul_dtype, has_wsc=has_wsc,
                           ncl_out=ncl_out)
    if ncl_out:
        out_shape = jax.ShapeDtypeStruct((n_seq_pad, planes_p, seq_len), out_dtype)
        out_spec = pl.BlockSpec((seqs_per_tile, planes_p, seq_len),
                                lambda i: (i, 0, 0))
    else:
        out_shape = jax.ShapeDtypeStruct((planes_p, nl_pad), out_dtype)
        out_spec = pl.BlockSpec((planes_p, tile), lambda i: (0, i))

    in_specs = [col_spec_h, col_spec_x,
                resident((planes_p, 1)), resident((planes_p, 1)),
                resident((3, planes_p, planes_p))]
    args = [h1, x2, scale2, shift2, w2p]
    if has_wsc:
        in_specs.append(resident((planes_p, cin_p)))
        args.append(wsc)
    in_specs.append(resident((2, tile)))
    args.append(conv_mask)

    k2_bytes = (2 * (cin_p + planes_p) * tile * act_bytes
                + 2 * planes_p * tile * out_bytes
                + (cin_p + 4 * planes_p) * tile * 4
                + 3 * planes_p * tile * act_bytes
                + (3 * planes_p + cin_p) * planes_p * act_bytes + 2 * tile * 4)
    out_arr = pl.pallas_call(
        k2,
        out_shape=out_shape,
        grid=(num_tiles,),
        in_specs=in_specs,
        out_specs=out_spec,
        compiler_params=pltpu.CompilerParams(
            dimension_semantics=("parallel",),
            vmem_limit_bytes=_vmem_limit(k2_bytes, phys_vmem)),
        cost_estimate=pl.CostEstimate(
            flops=int(2 * planes_p * (3 * planes_p +
                                      (cin_p if has_wsc else 0)) * nl_pad),
            transcendentals=0,
            bytes_accessed=int((cin_p + planes_p) * nl_pad * act_bytes
                               + planes_p * nl_pad * out_bytes)),
    )(*args)

    if ncl_out:
        return out_arr[:n, :planes, :]
    # Fallback (L not lane-aligned): keep the small XLA de-pad/transpose pass.
    out = out_arr[:planes, :nl].reshape(planes, n, seq_len)
    return jnp.transpose(out, (1, 0, 2))


# ------------------------------ reference ------------------------------------


def newblock2_reference(x, params, *, stride=1):
    """Pure-JAX reference (PyTorch training-mode forward semantics)."""
    def bn(h, g, b):
        mean = jnp.mean(h, axis=(0, 2), keepdims=True)
        var = jnp.mean((h - mean) ** 2, axis=(0, 2), keepdims=True)
        return (h - mean) / jnp.sqrt(var + _EPS) * g.reshape(1, -1, 1) + b.reshape(1, -1, 1)

    def conv(h, w, s, pad):
        return lax.conv_general_dilated(h, w, window_strides=(s,), padding=[(pad, pad)],
                                        dimension_numbers=("NCH", "OIH", "NCH"))

    h = jax.nn.relu(bn(x, params["bn1_g"], params["bn1_b"]))
    h = conv(h, params["conv1_w"], stride, 1)
    h = jax.nn.relu(bn(h, params["bn2_g"], params["bn2_b"]))
    h = conv(h, params["conv2_w"], 1, 1)
    sc = conv(x, params["shortcut_w"], stride, 0) if "shortcut_w" in params else x
    return h + sc


if __name__ == "__main__":
    key = jax.random.PRNGKey(0)
    kx1, kp1, kx2, kp2, kx3, kp3 = jax.random.split(key, 6)

    def make_params(k, cin, planes, with_shortcut):
        kw1, kw2, kws, kg1, kb1, kg2, kb2 = jax.random.split(k, 7)
        p = {
            "bn1_g": 1.0 + 0.1 * jax.random.normal(kg1, (cin,), jnp.float32),
            "bn1_b": 0.1 * jax.random.normal(kb1, (cin,), jnp.float32),
            "conv1_w": 0.2 * jax.random.normal(kw1, (planes, cin, 3), jnp.float32),
            "bn2_g": 1.0 + 0.1 * jax.random.normal(kg2, (planes,), jnp.float32),
            "bn2_b": 0.1 * jax.random.normal(kb2, (planes,), jnp.float32),
            "conv2_w": 0.2 * jax.random.normal(kw2, (planes, planes, 3), jnp.float32),
        }
        if with_shortcut:
            p["shortcut_w"] = 0.5 * jax.random.normal(kws, (planes, cin, 1), jnp.float32)
        return p

    # --- test 1: tiny shapes, f32, 1x1 shortcut, L=16 (flat-output fallback) ---
    n1, cin1, planes1, len1 = 2, 4, 8, 16
    x1 = jax.random.normal(kx1, (n1, cin1, len1), jnp.float32)
    p1 = make_params(kp1, cin1, planes1, with_shortcut=True)
    out1 = jax.block_until_ready(newblock2_forward(x1, p1, matmul_dtype=jnp.float32))
    ref1 = newblock2_reference(x1, p1)
    assert out1.shape == (n1, planes1, len1), out1.shape
    if not jnp.allclose(out1, ref1, atol=1e-4, rtol=1e-4):
        raise AssertionError("f32 Pallas output mismatches JAX reference (test 1)")

    # --- test 2: L=1024 (direct-NCL output path), identity shortcut; f32 + bf16 ---
    n2, cin2, planes2, len2 = 4, 32, 32, 1024
    x2 = jax.random.normal(kx2, (n2, cin2, len2), jnp.float32)
    p2 = make_params(kp2, cin2, planes2, with_shortcut=False)
    ref2 = newblock2_reference(x2, p2)

    out2_f32 = jax.block_until_ready(newblock2_forward(x2, p2, matmul_dtype=jnp.float32))
    assert out2_f32.shape == (n2, planes2, len2), out2_f32.shape
    if not jnp.allclose(out2_f32, ref2, atol=1e-3, rtol=1e-3):
        raise AssertionError("f32 Pallas output mismatches JAX reference (test 2)")

    out2_bf16 = jax.block_until_ready(newblock2_forward(x2, p2, matmul_dtype=jnp.bfloat16))
    rel_l2 = jnp.linalg.norm(out2_bf16 - ref2) / jnp.linalg.norm(ref2)
    if not bool(rel_l2 < 3e-2):
        raise AssertionError(f"bf16 Pallas output too far from reference: rel_l2={rel_l2}")

    # --- test 3: L=128 (NCL path) with a real 1x1 shortcut, cin != planes ---
    n3, cin3, planes3, len3 = 2, 8, 16, 128
    x3 = jax.random.normal(kx3, (n3, cin3, len3), jnp.float32)
    p3 = make_params(kp3, cin3, planes3, with_shortcut=True)
    out3 = jax.block_until_ready(newblock2_forward(x3, p3, matmul_dtype=jnp.float32))
    ref3 = newblock2_reference(x3, p3)
    assert out3.shape == (n3, planes3, len3), out3.shape
    if not jnp.allclose(out3, ref3, atol=1e-4, rtol=1e-4):
        raise AssertionError("f32 Pallas output mismatches JAX reference (test 3)")

    print("KERNEL_OK")
</pallas_src>

<mosaic_0001>
module attributes {stable_mosaic.version = 11 : i64} {
  func.func @_bn2_conv2_kernel(%arg0: i32, %arg1: memref<8x128xf32, #tpu.memory_space<vmem>>, %arg2: memref<8x128xf32, #tpu.memory_space<vmem>>, %arg3: memref<8x1xf32, #tpu.memory_space<vmem>>, %arg4: memref<8x1xf32, #tpu.memory_space<vmem>>, %arg5: memref<3x8x8xf32, #tpu.memory_space<vmem>>, %arg6: memref<8x8xf32, #tpu.memory_space<vmem>>, %arg7: memref<2x128xf32, #tpu.memory_space<vmem>>, %arg8: memref<8x128xf32, #tpu.memory_space<vmem>>) attributes {dimension_semantics = [#tpu.dimension_semantics<parallel>], iteration_bounds = array<i64: 1>, scalar_prefetch = 0 : i64, scratch_operands = 0 : i64, tpu.core_type = #tpu.core_type<tc>, window_params = [{transform_indices = @transform_0, window_bounds = array<i64: 8, 128>}, {transform_indices = @transform_1, window_bounds = array<i64: 8, 128>}, {pipeline_mode = #tpu.pipeline_mode<synchronous>, transform_indices = @transform_2, window_bounds = array<i64: 8, 1>}, {pipeline_mode = #tpu.pipeline_mode<synchronous>, transform_indices = @transform_3, window_bounds = array<i64: 8, 1>}, {pipeline_mode = #tpu.pipeline_mode<synchronous>, transform_indices = @transform_4, window_bounds = array<i64: 3, 8, 8>}, {pipeline_mode = #tpu.pipeline_mode<synchronous>, transform_indices = @transform_5, window_bounds = array<i64: 8, 8>}, {pipeline_mode = #tpu.pipeline_mode<synchronous>, transform_indices = @transform_6, window_bounds = array<i64: 2, 128>}, {transform_indices = @transform_7, window_bounds = array<i64: 8, 128>}]} {
    %c0 = arith.constant 0 : index
    %c0_0 = arith.constant 0 : index
    %0 = vector.load %arg1[%c0, %c0_0] : memref<8x128xf32, #tpu.memory_space<vmem>>, vector<8x128xf32>
    %c0_1 = arith.constant 0 : index
    %c0_2 = arith.constant 0 : index
    %1 = vector.load %arg3[%c0_1, %c0_2] : memref<8x1xf32, #tpu.memory_space<vmem>>, vector<8x1xf32>
    %2 = vector.broadcast %1 : vector<8x1xf32> to vector<8x128xf32>
    %3 = arith.mulf %0, %2 : vector<8x128xf32>
    %c0_3 = arith.constant 0 : index
    %c0_4 = arith.constant 0 : index
    %4 = vector.load %arg4[%c0_3, %c0_4] : memref<8x1xf32, #tpu.memory_space<vmem>>, vector<8x1xf32>
    %5 = vector.broadcast %4 : vector<8x1xf32> to vector<8x128xf32>
    %6 = arith.addf %3, %5 : vector<8x128xf32>
    %cst = arith.constant 0.000000e+00 : f32
    %7 = vector.broadcast %cst : f32 to vector<8x128xf32>
    %8 = arith.maximumf %6, %7 : vector<8x128xf32>
    %c0_5 = arith.constant 0 : index
    %c0_6 = arith.constant 0 : index
    %9 = vector.load %arg7[%c0_5, %c0_6] : memref<2x128xf32, #tpu.memory_space<vmem>>, vector<1x128xf32>
    %c1 = arith.constant 1 : index
    %c0_7 = arith.constant 0 : index
    %10 = vector.load %arg7[%c1, %c0_7] : memref<2x128xf32, #tpu.memory_space<vmem>>, vector<1x128xf32>
    %c1_i32 = arith.constant 1 : i32
    %11 = tpu.dynamic_rotate %8 by %c1_i32 dim 1 : vector<8x128xf32>, i32 -> vector<8x128xf32>
    %12 = vector.broadcast %9 : vector<1x128xf32> to vector<8x128xf32>
    %13 = arith.mulf %11, %12 : vector<8x128xf32>
    %c127_i32 = arith.constant 127 : i32
    %14 = tpu.dynamic_rotate %8 by %c127_i32 dim 1 : vector<8x128xf32>, i32 -> vector<8x128xf32>
    %15 = vector.broadcast %10 : vector<1x128xf32> to vector<8x128xf32>
    %16 = arith.mulf %14, %15 : vector<8x128xf32>
    %c0_8 = arith.constant 0 : index
    %c0_9 = arith.constant 0 : index
    %c0_10 = arith.constant 0 : index
    %17 = vector.load %arg5[%c0_8, %c0_9, %c0_10] : memref<3x8x8xf32, #tpu.memory_space<vmem>>, vector<1x8x8xf32>
    %18 = vector.shape_cast %17 : vector<1x8x8xf32> to vector<8x8xf32>
    %cst_11 = arith.constant dense<0.000000e+00> : vector<8x128xf32>
    %19 = tpu.matmul %18, %13, %cst_11 {dimension_numbers = #tpu.dot_dimension_numbers<[1], [0], [0], [1], [0, 0, 1, 1], [], []>} : vector<8x8xf32>, vector<8x128xf32>, vector<8x128xf32> -> vector<8x128xf32>
    %c1_12 = arith.constant 1 : index
    %c0_13 = arith.constant 0 : index
    %c0_14 = arith.constant 0 : index
    %20 = vector.load %arg5[%c1_12, %c0_13, %c0_14] : memref<3x8x8xf32, #tpu.memory_space<vmem>>, vector<1x8x8xf32>
    %21 = vector.shape_cast %20 : vector<1x8x8xf32> to vector<8x8xf32>
    %cst_15 = arith.constant dense<0.000000e+00> : vector<8x128xf32>
    %22 = tpu.matmul %21, %8, %cst_15 {dimension_numbers = #tpu.dot_dimension_numbers<[1], [0], [0], [1], [0, 0, 1, 1], [], []>} : vector<8x8xf32>, vector<8x128xf32>, vector<8x128xf32> -> vector<8x128xf32>
    %23 = arith.addf %19, %22 : vector<8x128xf32>
    %c2 = arith.constant 2 : index
    %c0_16 = arith.constant 0 : index
    %c0_17 = arith.constant 0 : index
    %24 = vector.load %arg5[%c2, %c0_16, %c0_17] : memref<3x8x8xf32, #tpu.memory_space<vmem>>, vector<1x8x8xf32>
    %25 = vector.shape_cast %24 : vector<1x8x8xf32> to vector<8x8xf32>
    %cst_18 = arith.constant dense<0.000000e+00> : vector<8x128xf32>
    %26 = tpu.matmul %25, %16, %cst_18 {dimension_numbers = #tpu.dot_dimension_numbers<[1], [0], [0], [1], [0, 0, 1, 1], [], []>} : vector<8x8xf32>, vector<8x128xf32>, vector<8x128xf32> -> vector<8x128xf32>
    %27 = arith.addf %23, %26 : vector<8x128xf32>
    %c0_19 = arith.constant 0 : index
    %c0_20 = arith.constant 0 : index
    %28 = vector.load %arg6[%c0_19, %c0_20] : memref<8x8xf32, #tpu.memory_space<vmem>>, vector<8x8xf32>
    %c0_21 = arith.constant 0 : index
    %c0_22 = arith.constant 0 : index
    %29 = vector.load %arg2[%c0_21, %c0_22] : memref<8x128xf32, #tpu.memory_space<vmem>>, vector<8x128xf32>
    %cst_23 = arith.constant dense<0.000000e+00> : vector<8x128xf32>
    %30 = tpu.matmul %28, %29, %cst_23 {dimension_numbers = #tpu.dot_dimension_numbers<[1], [0], [0], [1], [0, 0, 1, 1], [], []>} : vector<8x8xf32>, vector<8x128xf32>, vector<8x128xf32> -> vector<8x128xf32>
    %31 = arith.addf %27, %30 : vector<8x128xf32>
    %c0_24 = arith.constant 0 : index
    %c0_25 = arith.constant 0 : index
    %32 = vector.load %arg8[%c0_24, %c0_25] : memref<8x128xf32, #tpu.memory_space<vmem>>, vector<8x128xf32>
    tpu.vector_store %arg8[%c0_24, %c0_25], %31 {strides = array<i32>} : memref<8x128xf32, #tpu.memory_space<vmem>>, vector<8x128xf32>,
    return
  }
  func.func @transform_0(%arg0: i32) -> (i32, i32) {
    %c0_i32 = arith.constant 0 : i32
    %c0_i32_0 = arith.constant 0 : i32
    return %c0_i32, %arg0 : i32, i32
  }
  func.func @transform_1(%arg0: i32) -> (i32, i32) {
    %c0_i32 = arith.constant 0 : i32
    %c0_i32_0 = arith.constant 0 : i32
    return %c0_i32, %arg0 : i32, i32
  }
  func.func @transform_2(%arg0: i32) -> (i32, i32) {
    %c0_i32 = arith.constant 0 : i32
    %c0_i32_0 = arith.constant 0 : i32
    %c0_i32_1 = arith.constant 0 : i32
    return %c0_i32, %c0_i32_0 : i32, i32
  }
  func.func @transform_3(%arg0: i32) -> (i32, i32) {
    %c0_i32 = arith.constant 0 : i32
    %c0_i32_0 = arith.constant 0 : i32
    %c0_i32_1 = arith.constant 0 : i32
    return %c0_i32, %c0_i32_0 : i32, i32
  }
  func.func @transform_4(%arg0: i32) -> (i32, i32, i32) {
    %c0_i32 = arith.constant 0 : i32
    %c0_i32_0 = arith.constant 0 : i32
    %c0_i32_1 = arith.constant 0 : i32
    %c0_i32_2 = arith.constant 0 : i32
    return %c0_i32, %c0_i32_0, %c0_i32_1 : i32, i32, i32
  }
  func.func @transform_5(%arg0: i32) -> (i32, i32) {
    %c0_i32 = arith.constant 0 : i32
    %c0_i32_0 = arith.constant 0 : i32
    %c0_i32_1 = arith.constant 0 : i32
    return %c0_i32, %c0_i32_0 : i32, i32
  }
  func.func @transform_6(%arg0: i32) -> (i32, i32) {
    %c0_i32 = arith.constant 0 : i32
    %c0_i32_0 = arith.constant 0 : i32
    %c0_i32_1 = arith.constant 0 : i32
    return %c0_i32, %c0_i32_0 : i32, i32
  }
  func.func @transform_7(%arg0: i32) -> (i32, i32) {
    %c0_i32 = arith.constant 0 : i32
    %c0_i32_0 = arith.constant 0 : i32
    return %c0_i32, %arg0 : i32, i32
  }
}

module attributes {stable_mosaic.version = 11 : i64} {
  func.func @_bn1_conv1_kernel(%arg0: i32, %arg1: memref<8x128xf32, #tpu.memory_space<vmem>>, %arg2: memref<8x1xf32, #tpu.memory_space<vmem>>, %arg3: memref<8x1xf32, #tpu.memory_space<vmem>>, %arg4: memref<3x8x8xf32, #tpu.memory_space<vmem>>, %arg5: memref<2x128xf32, #tpu.memory_space<vmem>>, %arg6: memref<8x128xf32, #tpu.memory_space<vmem>>, %arg7: memref<1x8x1xf32, #tpu.memory_space<vmem>>, %arg8: memref<1x8x1xf32, #tpu.memory_space<vmem>>) attributes {dimension_semantics = [#tpu.dimension_semantics<parallel>], iteration_bounds = array<i64: 1>, scalar_prefetch = 0 : i64, scratch_operands = 0 : i64, tpu.core_type = #tpu.core_type<tc>, window_params = [{transform_indices = @transform_0, window_bounds = array<i64: 8, 128>}, {pipeline_mode = #tpu.pipeline_mode<synchronous>, transform_indices = @transform_1, window_bounds = array<i64: 8, 1>}, {pipeline_mode = #tpu.pipeline_mode<synchronous>, transform_indices = @transform_2, window_bounds = array<i64: 8, 1>}, {pipeline_mode = #tpu.pipeline_mode<synchronous>, transform_indices = @transform_3, window_bounds = array<i64: 3, 8, 8>}, {pipeline_mode = #tpu.pipeline_mode<synchronous>, transform_indices = @transform_4, window_bounds = array<i64: 2, 128>}, {transform_indices = @transform_5, window_bounds = array<i64: 8, 128>}, {transform_indices = @transform_6, window_bounds = array<i64: 1, 8, 1>}, {transform_indices = @transform_7, window_bounds = array<i64: 1, 8, 1>}]} {
    %c0 = arith.constant 0 : index
    %c0_0 = arith.constant 0 : index
    %0 = vector.load %arg1[%c0, %c0_0] : memref<8x128xf32, #tpu.memory_space<vmem>>, vector<8x128xf32>
    %c0_1 = arith.constant 0 : index
    %c0_2 = arith.constant 0 : index
    %1 = vector.load %arg2[%c0_1, %c0_2] : memref<8x1xf32, #tpu.memory_space<vmem>>, vector<8x1xf32>
    %2 = vector.broadcast %1 : vector<8x1xf32> to vector<8x128xf32>
    %3 = arith.mulf %0, %2 : vector<8x128xf32>
    %c0_3 = arith.constant 0 : index
    %c0_4 = arith.constant 0 : index
    %4 = vector.load %arg3[%c0_3, %c0_4] : memref<8x1xf32, #tpu.memory_space<vmem>>, vector<8x1xf32>
    %5 = vector.broadcast %4 : vector<8x1xf32> to vector<8x128xf32>
    %6 = arith.addf %3, %5 : vector<8x128xf32>
    %cst = arith.constant 0.000000e+00 : f32
    %7 = vector.broadcast %cst : f32 to vector<8x128xf32>
    %8 = arith.maximumf %6, %7 : vector<8x128xf32>
    %c0_5 = arith.constant 0 : index
    %c0_6 = arith.constant 0 : index
    %9 = vector.load %arg5[%c0_5, %c0_6] : memref<2x128xf32, #tpu.memory_space<vmem>>, vector<1x128xf32>
    %c1 = arith.constant 1 : index
    %c0_7 = arith.constant 0 : index
    %10 = vector.load %arg5[%c1, %c0_7] : memref<2x128xf32, #tpu.memory_space<vmem>>, vector<1x128xf32>
    %c1_i32 = arith.constant 1 : i32
    %11 = tpu.dynamic_rotate %8 by %c1_i32 dim 1 : vector<8x128xf32>, i32 -> vector<8x128xf32>
    %12 = vector.broadcast %9 : vector<1x128xf32> to vector<8x128xf32>
    %13 = arith.mulf %11, %12 : vector<8x128xf32>
    %c127_i32 = arith.constant 127 : i32
    %14 = tpu.dynamic_rotate %8 by %c127_i32 dim 1 : vector<8x128xf32>, i32 -> vector<8x128xf32>
    %15 = vector.broadcast %10 : vector<1x128xf32> to vector<8x128xf32>
    %16 = arith.mulf %14, %15 : vector<8x128xf32>
    %c0_8 = arith.constant 0 : index
    %c0_9 = arith.constant 0 : index
    %c0_10 = arith.constant 0 : index
    %17 = vector.load %arg4[%c0_8, %c0_9, %c0_10] : memref<3x8x8xf32, #tpu.memory_space<vmem>>, vector<1x8x8xf32>
    %18 = vector.shape_cast %17 : vector<1x8x8xf32> to vector<8x8xf32>
    %cst_11 = arith.constant dense<0.000000e+00> : vector<8x128xf32>
    %19 = tpu.matmul %18, %13, %cst_11 {dimension_numbers = #tpu.dot_dimension_numbers<[1], [0], [0], [1], [0, 0, 1, 1], [], []>} : vector<8x8xf32>, vector<8x128xf32>, vector<8x128xf32> -> vector<8x128xf32>
    %c1_12 = arith.constant 1 : index
    %c0_13 = arith.constant 0 : index
    %c0_14 = arith.constant 0 : index
    %20 = vector.load %arg4[%c1_12, %c0_13, %c0_14] : memref<3x8x8xf32, #tpu.memory_space<vmem>>, vector<1x8x8xf32>
    %21 = vector.shape_cast %20 : vector<1x8x8xf32> to vector<8x8xf32>
    %cst_15 = arith.constant dense<0.000000e+00> : vector<8x128xf32>
    %22 = tpu.matmul %21, %8, %cst_15 {dimension_numbers = #tpu.dot_dimension_numbers<[1], [0], [0], [1], [0, 0, 1, 1], [], []>} : vector<8x8xf32>, vector<8x128xf32>, vector<8x128xf32> -> vector<8x128xf32>
    %23 = arith.addf %19, %22 : vector<8x128xf32>
    %c2 = arith.constant 2 : index
    %c0_16 = arith.constant 0 : index
    %c0_17 = arith.constant 0 : index
    %24 = vector.load %arg4[%c2, %c0_16, %c0_17] : memref<3x8x8xf32, #tpu.memory_space<vmem>>, vector<1x8x8xf32>
    %25 = vector.shape_cast %24 : vector<1x8x8xf32> to vector<8x8xf32>
    %cst_18 = arith.constant dense<0.000000e+00> : vector<8x128xf32>
    %26 = tpu.matmul %25, %16, %cst_18 {dimension_numbers = #tpu.dot_dimension_numbers<[1], [0], [0], [1], [0, 0, 1, 1], [], []>} : vector<8x8xf32>, vector<8x128xf32>, vector<8x128xf32> -> vector<8x128xf32>
    %27 = arith.addf %23, %26 : vector<8x128xf32>
    %c0_19 = arith.constant 0 : index
    %c0_20 = arith.constant 0 : index
    %28 = vector.load %arg6[%c0_19, %c0_20] : memref<8x128xf32, #tpu.memory_space<vmem>>, vector<8x128xf32>
    tpu.vector_store %arg6[%c0_19, %c0_20], %27 {strides = array<i32>} : memref<8x128xf32, #tpu.memory_space<vmem>>, vector<8x128xf32>,
    %c1_i32_21 = arith.constant 1 : i32
    %29 = arith.addi %arg0, %c1_i32_21 : i32
    %c128_i32 = arith.constant 128 : i32
    %30 = arith.muli %29, %c128_i32 : i32
    %c32_i32 = arith.constant 32 : i32
    %31 = arith.cmpi sle, %30, %c32_i32 : i32
    %32 = arith.extui %31 : i1 to i32
    %c0_i32 = arith.constant 0 : i32
    %33 = arith.cmpi ne, %32, %c0_i32 : i32
    scf.if %33 {
      %cst_23 = arith.constant dense<0.000000e+00> : vector<8xf32>
      %37 = vector.multi_reduction <add>, %27, %cst_23 [1] : vector<8x128xf32> to vector<8xf32>
      %38 = vector.shape_cast %37 : vector<8xf32> to vector<8x1xf32>
      %c0_24 = arith.constant 0 : index
      %c0_25 = arith.constant 0 : index
      %c0_26 = arith.constant 0 : index
      %39 = vector.load %arg7[%c0_24, %c0_25, %c0_26] : memref<1x8x1xf32, #tpu.memory_space<vmem>>, vector<1x8x1xf32>
      %40 = vector.shape_cast %39 : vector<1x8x1xf32> to vector<8x1xf32>
      %41 = vector.shape_cast %38 : vector<8x1xf32> to vector<1x8x1xf32>
      tpu.vector_store %arg7[%c0_24, %c0_25, %c0_26], %41 {strides = array<i32>} : memref<1x8x1xf32, #tpu.memory_space<vmem>>, vector<1x8x1xf32>,
      %42 = arith.mulf %27, %27 : vector<8x128xf32>
      %cst_27 = arith.constant dense<0.000000e+00> : vector<8xf32>
      %43 = vector.multi_reduction <add>, %42, %cst_27 [1] : vector<8x128xf32> to vector<8xf32>
      %44 = vector.shape_cast %43 : vector<8xf32> to vector<8x1xf32>
      %c0_28 = arith.constant 0 : index
      %c0_29 = arith.constant 0 : index
      %c0_30 = arith.constant 0 : index
      %45 = vector.load %arg8[%c0_28, %c0_29, %c0_30] : memref<1x8x1xf32, #tpu.memory_space<vmem>>, vector<1x8x1xf32>
      %46 = vector.shape_cast %45 : vector<1x8x1xf32> to vector<8x1xf32>
      %47 = vector.shape_cast %44 : vector<8x1xf32> to vector<1x8x1xf32>
      tpu.vector_store %arg8[%c0_28, %c0_29, %c0_30], %47 {strides = array<i32>} : memref<1x8x1xf32, #tpu.memory_space<vmem>>, vector<1x8x1xf32>,
    } else {
    }
    %true = arith.constant true
    %34 = arith.xori %31, %true : i1
    %35 = arith.extui %34 : i1 to i32
    %c0_i32_22 = arith.constant 0 : i32
    %36 = arith.cmpi ne, %35, %c0_i32_22 : i32
    scf.if %36 {
      %37 = tpu.iota {dimensions = array<i32: 1>} : vector<1x128xi32>
      %c128_i32_23 = arith.constant 128 : i32
      %38 = arith.muli %arg0, %c128_i32_23 : i32
      %39 = vector.broadcast %38 : i32 to vector<1x128xi32>
      %40 = arith.addi %39, %37 : vector<1x128xi32>
      %c32_i32_24 = arith.constant 32 : i32
      %41 = vector.broadcast %c32_i32_24 : i32 to vector<1x128xi32>
      %42 = arith.cmpi slt, %40, %41 : vector<1x128xi32>
      %43 = arith.extui %42 : vector<1x128xi1> to vector<1x128xi32>
      %44 = arith.sitofp %43 : vector<1x128xi32> to vector<1x128xf32>
      %45 = vector.broadcast %44 : vector<1x128xf32> to vector<8x128xf32>
      %46 = arith.mulf %27, %45 : vector<8x128xf32>
      %cst_25 = arith.constant dense<0.000000e+00> : vector<8xf32>
      %47 = vector.multi_reduction <add>, %46, %cst_25 [1] : vector<8x128xf32> to vector<8xf32>
      %48 = vector.shape_cast %47 : vector<8xf32> to vector<8x1xf32>
      %c0_26 = arith.constant 0 : index
      %c0_27 = arith.constant 0 : index
      %c0_28 = arith.constant 0 : index
      %49 = vector.load %arg7[%c0_26, %c0_27, %c0_28] : memref<1x8x1xf32, #tpu.memory_space<vmem>>, vector<1x8x1xf32>
      %50 = vector.shape_cast %49 : vector<1x8x1xf32> to vector<8x1xf32>
      %51 = vector.shape_cast %48 : vector<8x1xf32> to vector<1x8x1xf32>
      tpu.vector_store %arg7[%c0_26, %c0_27, %c0_28], %51 {strides = array<i32>} : memref<1x8x1xf32, #tpu.memory_space<vmem>>, vector<1x8x1xf32>,
      %52 = arith.mulf %46, %46 : vector<8x128xf32>
      %cst_29 = arith.constant dense<0.000000e+00> : vector<8xf32>
      %53 = vector.multi_reduction <add>, %52, %cst_29 [1] : vector<8x128xf32> to vector<8xf32>
      %54 = vector.shape_cast %53 : vector<8xf32> to vector<8x1xf32>
      %c0_30 = arith.constant 0 : index
      %c0_31 = arith.constant 0 : index
      %c0_32 = arith.constant 0 : index
      %55 = vector.load %arg8[%c0_30, %c0_31, %c0_32] : memref<1x8x1xf32, #tpu.memory_space<vmem>>, vector<1x8x1xf32>
      %56 = vector.shape_cast %55 : vector<1x8x1xf32> to vector<8x1xf32>
      %57 = vector.shape_cast %54 : vector<8x1xf32> to vector<1x8x1xf32>
      tpu.vector_store %arg8[%c0_30, %c0_31, %c0_32], %57 {strides = array<i32>} : memref<1x8x1xf32, #tpu.memory_space<vmem>>, vector<1x8x1xf32>,
    } else {
    }
    return
  }
  func.func @transform_0(%arg0: i32) -> (i32, i32) {
    %c0_i32 = arith.constant 0 : i32
    %c0_i32_0 = arith.constant 0 : i32
    return %c0_i32, %arg0 : i32, i32
  }
  func.func @transform_1(%arg0: i32) -> (i32, i32) {
    %c0_i32 = arith.constant 0 : i32
    %c0_i32_0 = arith.constant 0 : i32
    %c0_i32_1 = arith.constant 0 : i32
    return %c0_i32, %c0_i32_0 : i32, i32
  }
  func.func @transform_2(%arg0: i32) -> (i32, i32) {
    %c0_i32 = arith.constant 0 : i32
    %c0_i32_0 = arith.constant 0 : i32
    %c0_i32_1 = arith.constant 0 : i32
    return %c0_i32, %c0_i32_0 : i32, i32
  }
  func.func @transform_3(%arg0: i32) -> (i32, i32, i32) {
    %c0_i32 = arith.constant 0 : i32
    %c0_i32_0 = arith.constant 0 : i32
    %c0_i32_1 = arith.constant 0 : i32
    %c0_i32_2 = arith.constant 0 : i32
    return %c0_i32, %c0_i32_0, %c0_i32_1 : i32, i32, i32
  }
  func.func @transform_4(%arg0: i32) -> (i32, i32) {
    %c0_i32 = arith.constant 0 : i32
    %c0_i32_0 = arith.constant 0 : i32
    %c0_i32_1 = arith.constant 0 : i32
    return %c0_i32, %c0_i32_0 : i32, i32
  }
  func.func @transform_5(%arg0: i32) -> (i32, i32) {
    %c0_i32 = arith.constant 0 : i32
    %c0_i32_0 = arith.constant 0 : i32
    return %c0_i32, %arg0 : i32, i32
  }
  func.func @transform_6(%arg0: i32) -> (i32, i32, i32) {
    %c0_i32 = arith.constant 0 : i32
    %c0_i32_0 = arith.constant 0 : i32
    %c0_i32_1 = arith.constant 0 : i32
    return %arg0, %c0_i32, %c0_i32_0 : i32, i32, i32
  }
  func.func @transform_7(%arg0: i32) -> (i32, i32, i32) {
    %c0_i32 = arith.constant 0 : i32
    %c0_i32_0 = arith.constant 0 : i32
    %c0_i32_1 = arith.constant 0 : i32
    return %arg0, %c0_i32, %c0_i32_0 : i32, i32, i32
  }
}

</mosaic_0001>

<llo_original>
// kernel: newblock2_forward.3
$region0: #{newblock2_forward.3}
  #allocation0 [shape = 'u32[]', space=smem, size = 0x4, offset = 0x4, fixed_abs, tag = 'smem constant byte address 0x4 - core index']
  #allocation1 [shape = 'u32[72,128]{1,0:T(1,128)}', space=vmem, size = 0x9000, scoped, tag = 'internal scratch']
  %s0 = inlined_call_operand.vmem [shape: f32[8,128], index: 0, kind: input, shape index: {}]
  %s1 = inlined_call_operand.vmem [shape: f32[8,128], index: 1, kind: input, shape index: {}]
  %s2 = inlined_call_operand.vmem [shape: f32[8,1], index: 2, kind: input, shape index: {}]
  %s3 = inlined_call_operand.vmem [shape: f32[8,1], index: 3, kind: input, shape index: {}]
  %s4 = inlined_call_operand.vmem [shape: f32[3,8,8], index: 4, kind: input, shape index: {}]
  %s5 = inlined_call_operand.vmem [shape: f32[8,8], index: 5, kind: input, shape index: {}]
  %s6 = inlined_call_operand.vmem [shape: f32[2,128], index: 6, kind: input, shape index: {}]
  %s7 = inlined_call_operand.vmem [shape: f32[8,128], index: 7, kind: output, shape index: {}]
  %s8 = sld [smem:[#allocation0]]
  $region38: #{newblock2_forward.3} parent=0
    _
  %s10 = ssub.s32 1, %s8
  %s11 = scalar_select 0, %s10, %s8
  // Predicated region
  $region2: #{newblock2_forward.3} parent=0 // pred_check
    _
  $region3: #{newblock2_forward.3} parent=0 // pred_check_branch
    %13 = sbr.rel (0) target = $region5
  $region4: #{newblock2_forward.3} parent=0 // pred_region
    _
  $region5: #{newblock2_forward.3} parent=0 // pred_fallthru
    _
  // Predicated region
  $region6: #{newblock2_forward.3} parent=0 // pred_check
    _
  $region7: #{newblock2_forward.3} parent=0 // pred_check_branch
    %15 = sbr.rel (0) target = $region9
  $region8: #{newblock2_forward.3} parent=0 // pred_region
    _
  $region9: #{newblock2_forward.3} parent=0 // pred_fallthru
    _
  // Predicated region
  $region10: #{newblock2_forward.3} parent=0 // pred_check
    _
  $region11: #{newblock2_forward.3} parent=0 // pred_check_branch
    %17 = sbr.rel (0) target = $region13
  $region12: #{newblock2_forward.3} parent=0 // pred_region
    _
  $region13: #{newblock2_forward.3} parent=0 // pred_fallthru
    _
  // Predicated region
  $region14: #{newblock2_forward.3} parent=0 // pred_check
    _
  $region15: #{newblock2_forward.3} parent=0 // pred_check_branch
    %19 = sbr.rel (0) target = $region17
  $region16: #{newblock2_forward.3} parent=0 // pred_region
    _
  $region17: #{newblock2_forward.3} parent=0 // pred_fallthru
    _
  // Predicated region
  $region18: #{newblock2_forward.3} parent=0 // pred_check
    _
  $region19: #{newblock2_forward.3} parent=0 // pred_check_branch
    %21 = sbr.rel (0) target = $region21
  $region20: #{newblock2_forward.3} parent=0 // pred_region
    _
  $region21: #{newblock2_forward.3} parent=0 // pred_fallthru
    _
  // Predicated region
  $region22: #{newblock2_forward.3} parent=0 // pred_check
    _
  $region23: #{newblock2_forward.3} parent=0 // pred_check_branch
    %23 = sbr.rel (0) target = $region25
  $region24: #{newblock2_forward.3} parent=0 // pred_region
    _
  $region25: #{newblock2_forward.3} parent=0 // pred_fallthru
    _
  // Predicated region
  $region26: #{newblock2_forward.3} parent=0 // pred_check
    _
  $region27: #{newblock2_forward.3} parent=0 // pred_check_branch
    %25 = sbr.rel (0) target = $region29
  $region28: #{newblock2_forward.3} parent=0 // pred_region
    _
  $region29: #{newblock2_forward.3} parent=0 // pred_fallthru
    _
  %v26 = vld [vmem:[%s0] sm:$0xff]
  %v27 = vld [vmem:[%s2] sm:$0xff]
  %29 = vset.pattern.permute.xlu0 0
  %30 = vperm.xlu0 %29, %v27
  %v31 = vpop.permute.xlu0 %30
  %v33 = vmul.f32 %v26, %v31
  %v34 = vld [vmem:[%s3] sm:$0xff]
  %36 = vset.pattern.permute.xlu0 0
  %37 = vperm.xlu0 %36, %v34
  %v38 = vpop.permute.xlu0 %37
  %v40 = vadd.f32 %v33, %v38
  %v41 = vmax.f32 %v40, 0.0
  %v42 = vld [vmem:[%s6] sm:$0x1]
  %v43 = vld [vmem:[%s6 + $0x1] sm:$0x1]
  %44 = vrot.lane.b32.xlu0 %v41, 1
  %v45 = vpop.permute.xlu0 %44
  %v46 = vperm.slane %v42, 0
  %v47 = vmul.f32 %v45, %v46
  %48 = vrot.lane.b32.xlu0 %v41, 127
  %v49 = vpop.permute.xlu0 %48
  %v50 = vperm.slane %v43, 0
  %v51 = vmul.f32 %v49, %v50
  %v52 = vld [vmem:[%s4] sm:$0xff]
  %s53 = scalar_lea.vmem %s4, 8
  %v54 = vld [vmem:[%s53] sm:$0xff]
  %vm55 = vcmask 64512
  %v57 = vsel %vm55, %v54, 0
  %59 = vmatpush.msra.mxu0 0.0
  %60 = vmatpush.msra.mxu0 0.0
  %61 = vmatpush.msra.mxu0 0.0
  %62 = vmatpush.msra.mxu0 0.0
  %63 = vmatpush.msra.mxu0 0.0
  %64 = vmatpush.msra.mxu0 0.0
  %65 = vmatpush.msra.mxu0 0.0
  %66 = vmatpush.msra.mxu0 0.0
  %67 = vmatpush.msra.mxu0 0.0
  %68 = vmatpush.msra.mxu0 0.0
  %69 = vmatpush.msra.mxu0 0.0
  %70 = vmatpush.msra.mxu0 0.0
  %71 = vmatpush.msra.mxu0 0.0
  %72 = vmatpush.msra.mxu0 0.0
  %73 = vmatpush.msra.mxu0 0.0
  %74 = vmatpush.msra.mxu0 %v41
  %75 = vmatmul.f32.gmra.mxu0 %v57
  %v76 = vpop.f32.mrf.mxu0
  %v77 = vadd.f32 0.0, %v76
  %78 = vdwg.mxu0
  %v80 = vsel %vm55, %v52, 0
  %82 = vmatpush.msra.mxu0 0.0
  %83 = vmatpush.msra.mxu0 0.0
  %84 = vmatpush.msra.mxu0 0.0
  %85 = vmatpush.msra.mxu0 0.0
  %86 = vmatpush.msra.mxu0 0.0
  %87 = vmatpush.msra.mxu0 0.0
  %88 = vmatpush.msra.mxu0 0.0
  %89 = vmatpush.msra.mxu0 0.0
  %90 = vmatpush.msra.mxu0 0.0
  %91 = vmatpush.msra.mxu0 0.0
  %92 = vmatpush.msra.mxu0 0.0
  %93 = vmatpush.msra.mxu0 0.0
  %94 = vmatpush.msra.mxu0 0.0
  %95 = vmatpush.msra.mxu0 0.0
  %96 = vmatpush.msra.mxu0 0.0
  %97 = vmatpush.msra.mxu0 %v47
  %98 = vmatmul.f32.gmra.mxu0 %v80
  %v99 = vpop.f32.mrf.mxu0
  %v100 = vadd.f32 %v77, %v99
  %101 = vdwg.mxu0
  %s102 = scalar_lea.vmem %s4, 16
  %v103 = vld [vmem:[%s102] sm:$0xff]
  %v105 = vsel %vm55, %v103, 0
  %107 = vmatpush.msra.mxu0 0.0
  %108 = vmatpush.msra.mxu0 0.0
  %109 = vmatpush.msra.mxu0 0.0
  %110 = vmatpush.msra.mxu0 0.0
  %111 = vmatpush.msra.mxu0 0.0
  %112 = vmatpush.msra.mxu0 0.0
  %113 = vmatpush.msra.mxu0 0.0
  %114 = vmatpush.msra.mxu0 0.0
  %115 = vmatpush.msra.mxu0 0.0
  %116 = vmatpush.msra.mxu0 0.0
  %117 = vmatpush.msra.mxu0 0.0
  %118 = vmatpush.msra.mxu0 0.0
  %119 = vmatpush.msra.mxu0 0.0
  %120 = vmatpush.msra.mxu0 0.0
  %121 = vmatpush.msra.mxu0 0.0
  %122 = vmatpush.msra.mxu0 %v51
  %123 = vmatmul.f32.gmra.mxu0 %v105
  %v124 = vpop.f32.mrf.mxu0
  %v125 = vadd.f32 0.0, %v124
  %126 = vdwg.mxu0
  %v127 = vadd.f32 %v100, %v125
  %v128 = vld [vmem:[%s5] sm:$0xff]
  %v129 = vld [vmem:[%s1] sm:$0xff]
  %v131 = vsel %vm55, %v128, 0
  %133 = vmatpush.msra.mxu0 0.0
  %134 = vmatpush.msra.mxu0 0.0
  %135 = vmatpush.msra.mxu0 0.0
  %136 = vmatpush.msra.mxu0 0.0
  %137 = vmatpush.msra.mxu0 0.0
  %138 = vmatpush.msra.mxu0 0.0
  %139 = vmatpush.msra.mxu0 0.0
  %140 = vmatpush.msra.mxu0 0.0
  %141 = vmatpush.msra.mxu0 0.0
  %142 = vmatpush.msra.mxu0 0.0
  %143 = vmatpush.msra.mxu0 0.0
  %144 = vmatpush.msra.mxu0 0.0
  %145 = vmatpush.msra.mxu0 0.0
  %146 = vmatpush.msra.mxu0 0.0
  %147 = vmatpush.msra.mxu0 0.0
  %148 = vmatpush.msra.mxu0 %v129
  %149 = vmatmul.f32.gmra.mxu0 %v131
  %v150 = vpop.f32.mrf.mxu0
  %v151 = vadd.f32 0.0, %v150
  %152 = vdwg.mxu0
  %v153 = vadd.f32 %v127, %v151
  %154 = vst [vmem:[%s7] sm:$0xff] %v153
  // Predicated region
  $region30: #{newblock2_forward.3} parent=0 // pred_check
    _
  $region31: #{newblock2_forward.3} parent=0 // pred_check_branch
    %156 = sbr.rel (0) target = $region33
  $region32: #{newblock2_forward.3} parent=0 // pred_region
    _
  $region33: #{newblock2_forward.3} parent=0 // pred_fallthru
    _
  // Predicated region
  $region34: #{newblock2_forward.3} parent=0 // pred_check
    _
  $region35: #{newblock2_forward.3} parent=0 // pred_check_branch
    %158 = sbr.rel (0) target = $region37
  $region36: #{newblock2_forward.3} parent=0 // pred_region
    _
  $region37: #{newblock2_forward.3} parent=0 // pred_fallthru
    _

// kernel: newblock2_forward.2
$region0: #{newblock2_forward.2}
  #allocation0 [shape = 'u32[]', space=smem, size = 0x4, offset = 0x4, fixed_abs, tag = 'smem constant byte address 0x4 - core index']
  #allocation1 [shape = 'u32[72,128]{1,0:T(1,128)}', space=vmem, size = 0x9000, scoped, tag = 'internal scratch']
  %s0 = inlined_call_operand.vmem [shape: f32[8,128], index: 0, kind: input, shape index: {}]
  %s1 = inlined_call_operand.vmem [shape: f32[8,1], index: 1, kind: input, shape index: {}]
  %s2 = inlined_call_operand.vmem [shape: f32[8,1], index: 2, kind: input, shape index: {}]
  %s3 = inlined_call_operand.vmem [shape: f32[3,8,8], index: 3, kind: input, shape index: {}]
  %s4 = inlined_call_operand.vmem [shape: f32[2,128], index: 4, kind: input, shape index: {}]
  %s5 = inlined_call_operand.vmem [shape: f32[8,128], index: 5, kind: output, shape index: {0}]
  %s6 = inlined_call_operand.vmem [shape: f32[1,8,1], index: 6, kind: output, shape index: {1}]
  %s7 = inlined_call_operand.vmem [shape: f32[1,8,1], index: 7, kind: output, shape index: {2}]
  %8 = xla_tuple %s5, %s6, %s7
  %s9 = sld [smem:[#allocation0]]
  $region54: #{newblock2_forward.2} parent=0
    _
  %s11 = ssub.s32 1, %s9
  %s12 = scalar_select 0, %s11, %s9
  // Predicated region
  $region2: #{newblock2_forward.2} parent=0 // pred_check
    _
  $region3: #{newblock2_forward.2} parent=0 // pred_check_branch
    %14 = sbr.rel (0) target = $region5
  $region4: #{newblock2_forward.2} parent=0 // pred_region
    _
  $region5: #{newblock2_forward.2} parent=0 // pred_fallthru
    _
  // Predicated region
  $region6: #{newblock2_forward.2} parent=0 // pred_check
    _
  $region7: #{newblock2_forward.2} parent=0 // pred_check_branch
    %16 = sbr.rel (0) target = $region9
  $region8: #{newblock2_forward.2} parent=0 // pred_region
    _
  $region9: #{newblock2_forward.2} parent=0 // pred_fallthru
    _
  // Predicated region
  $region10: #{newblock2_forward.2} parent=0 // pred_check
    _
  $region11: #{newblock2_forward.2} parent=0 // pred_check_branch
    %18 = sbr.rel (0) target = $region13
  $region12: #{newblock2_forward.2} parent=0 // pred_region
    _
  $region13: #{newblock2_forward.2} parent=0 // pred_fallthru
    _
  // Predicated region
  $region14: #{newblock2_forward.2} parent=0 // pred_check
    _
  $region15: #{newblock2_forward.2} parent=0 // pred_check_branch
    %20 = sbr.rel (0) target = $region17
  $region16: #{newblock2_forward.2} parent=0 // pred_region
    _
  $region17: #{newblock2_forward.2} parent=0 // pred_fallthru
    _
  // Predicated region
  $region18: #{newblock2_forward.2} parent=0 // pred_check
    _
  $region19: #{newblock2_forward.2} parent=0 // pred_check_branch
    %22 = sbr.rel (0) target = $region21
  $region20: #{newblock2_forward.2} parent=0 // pred_region
    _
  $region21: #{newblock2_forward.2} parent=0 // pred_fallthru
    _
  %v23 = vld [vmem:[%s0] sm:$0xff]
  %v24 = vld [vmem:[%s1] sm:$0xff]
  %26 = vset.pattern.permute.xlu0 0
  %27 = vperm.xlu0 %26, %v24
  %v28 = vpop.permute.xlu0 %27
  %v30 = vmul.f32 %v23, %v28
  %v31 = vld [vmem:[%s2] sm:$0xff]
  %33 = vset.pattern.permute.xlu0 0
  %34 = vperm.xlu0 %33, %v31
  %v35 = vpop.permute.xlu0 %34
  %v37 = vadd.f32 %v30, %v35
  %v38 = vmax.f32 %v37, 0.0
  %v39 = vld [vmem:[%s4] sm:$0x1]
  %v40 = vld [vmem:[%s4 + $0x1] sm:$0x1]
  %41 = vrot.lane.b32.xlu0 %v38, 1
  %v42 = vpop.permute.xlu0 %41
  %v43 = vperm.slane %v39, 0
  %v44 = vmul.f32 %v42, %v43
  %45 = vrot.lane.b32.xlu0 %v38, 127
  %v46 = vpop.permute.xlu0 %45
  %v47 = vperm.slane %v40, 0
  %v48 = vmul.f32 %v46, %v47
  %v49 = vld [vmem:[%s3] sm:$0xff]
  %s50 = scalar_lea.vmem %s3, 8
  %v51 = vld [vmem:[%s50] sm:$0xff]
  %vm52 = vcmask 64512
  %v54 = vsel %vm52, %v51, 0
  %56 = vmatpush.msra.mxu0 0.0
  %57 = vmatpush.msra.mxu0 0.0
  %58 = vmatpush.msra.mxu0 0.0
  %59 = vmatpush.msra.mxu0 0.0
  %60 = vmatpush.msra.mxu0 0.0
  %61 = vmatpush.msra.mxu0 0.0
  %62 = vmatpush.msra.mxu0 0.0
  %63 = vmatpush.msra.mxu0 0.0
  %64 = vmatpush.msra.mxu0 0.0
  %65 = vmatpush.msra.mxu0 0.0
  %66 = vmatpush.msra.mxu0 0.0
  %67 = vmatpush.msra.mxu0 0.0
  %68 = vmatpush.msra.mxu0 0.0
  %69 = vmatpush.msra.mxu0 0.0
  %70 = vmatpush.msra.mxu0 0.0
  %71 = vmatpush.msra.mxu0 %v38
  %72 = vmatmul.f32.gmra.mxu0 %v54
  %v73 = vpop.f32.mrf.mxu0
  %v74 = vadd.f32 0.0, %v73
  %75 = vdwg.mxu0
  %v77 = vsel %vm52, %v49, 0
  %79 = vmatpush.msra.mxu0 0.0
  %80 = vmatpush.msra.mxu0 0.0
  %81 = vmatpush.msra.mxu0 0.0
  %82 = vmatpush.msra.mxu0 0.0
  %83 = vmatpush.msra.mxu0 0.0
  %84 = vmatpush.msra.mxu0 0.0
  %85 = vmatpush.msra.mxu0 0.0
  %86 = vmatpush.msra.mxu0 0.0
  %87 = vmatpush.msra.mxu0 0.0
  %88 = vmatpush.msra.mxu0 0.0
  %89 = vmatpush.msra.mxu0 0.0
  %90 = vmatpush.msra.mxu0 0.0
  %91 = vmatpush.msra.mxu0 0.0
  %92 = vmatpush.msra.mxu0 0.0
  %93 = vmatpush.msra.mxu0 0.0
  %94 = vmatpush.msra.mxu0 %v44
  %95 = vmatmul.f32.gmra.mxu0 %v77
  %v96 = vpop.f32.mrf.mxu0
  %v97 = vadd.f32 %v74, %v96
  %98 = vdwg.mxu0
  %s99 = scalar_lea.vmem %s3, 16
  %v100 = vld [vmem:[%s99] sm:$0xff]
  %v102 = vsel %vm52, %v100, 0
  %104 = vmatpush.msra.mxu0 0.0
  %105 = vmatpush.msra.mxu0 0.0
  %106 = vmatpush.msra.mxu0 0.0
  %107 = vmatpush.msra.mxu0 0.0
  %108 = vmatpush.msra.mxu0 0.0
  %109 = vmatpush.msra.mxu0 0.0
  %110 = vmatpush.msra.mxu0 0.0
  %111 = vmatpush.msra.mxu0 0.0
  %112 = vmatpush.msra.mxu0 0.0
  %113 = vmatpush.msra.mxu0 0.0
  %114 = vmatpush.msra.mxu0 0.0
  %115 = vmatpush.msra.mxu0 0.0
  %116 = vmatpush.msra.mxu0 0.0
  %117 = vmatpush.msra.mxu0 0.0
  %118 = vmatpush.msra.mxu0 0.0
  %119 = vmatpush.msra.mxu0 %v48
  %120 = vmatmul.f32.gmra.mxu0 %v102
  %v121 = vpop.f32.mrf.mxu0
  %v122 = vadd.f32 0.0, %v121
  %123 = vdwg.mxu0
  %v124 = vadd.f32 %v97, %v122
  %125 = vst [vmem:[%s5] sm:$0xff] %v124
  %s126 = sadd.s32 0, 1
  %s127 = smul.u32 %s126, 128
  %p128 = scmp.le.s32.totalorder %s127, 32
  // Predicated region
  $region22: #{newblock2_forward.2} parent=0 // pred_check
    %p129 = pneg %p128
  $region23: #{newblock2_forward.2} parent=0 // pred_check_branch
    %131 = sbr.rel (%p129) target = $region25
  $region24: #{newblock2_forward.2} parent=0 // pred_region
    %132 = vadd.xlane.f32.xlu0 %v124
    %v133 = vpop.xlane.xlu0 %132
    %vm134 = vcmask 7168
    %135 = vst.msk [vmem:[%s6] sm:$0xff] %vm134, %v133
    %v136 = vmul.f32 %v124, %v124
    %137 = vadd.xlane.f32.xlu0 %v136
    %v138 = vpop.xlane.xlu0 %137
    %139 = vst.msk [vmem:[%s7] sm:$0xff] %vm134, %v138
  $region25: #{newblock2_forward.2} parent=0 // pred_fallthru
    _
  %p140 = scmp.gt.s32.totalorder %s127, 32
  // Predicated region
  $region26: #{newblock2_forward.2} parent=0 // pred_check
    %p141 = pneg %p140
  $region27: #{newblock2_forward.2} parent=0 // pred_check_branch
    %143 = sbr.rel (%p141) target = $region29
  $region28: #{newblock2_forward.2} parent=0 // pred_region
    %v144 = vlaneseq
    %v145 = vand.u32 %v144, 127
    %s146 = smul.u32 0, 128
    %v147 = vstv %s146
    %v148 = vadd.s32 %v147, %v145
    %vm149 = vcmp.lt.s32.totalorder %v148, 32
    %v150 = vsel %vm149, 1, 0
    %v151 = vcvt.s32.f32 %v150
    %v152 = vmul.f32 %v124, %v151
    %153 = vadd.xlane.f32.xlu0 %v152
    %v154 = vpop.xlane.xlu0 %153
    %vm155 = vcmask 7168
    %156 = vst.msk [vmem:[%s6] sm:$0xff] %vm155, %v154
    %v157 = vmul.f32 %v152, %v152
    %158 = vadd.xlane.f32.xlu0 %v157
    %v159 = vpop.xlane.xlu0 %158
    %160 = vst.msk [vmem:[%s7] sm:$0xff] %vm155, %v159
  $region29: #{newblock2_forward.2} parent=0 // pred_fallthru
    _
  // Predicated region
  $region30: #{newblock2_forward.2} parent=0 // pred_check
    _
  $region31: #{newblock2_forward.2} parent=0 // pred_check_branch
    %162 = sbr.rel (0) target = $region33
  $region32: #{newblock2_forward.2} parent=0 // pred_region
    _
  $region33: #{newblock2_forward.2} parent=0 // pred_fallthru
    _
  // Predicated region
  $region34: #{newblock2_forward.2} parent=0 // pred_check
    _
  $region35: #{newblock2_forward.2} parent=0 // pred_check_branch
    %164 = sbr.rel (0) target = $region37
  $region36: #{newblock2_forward.2} parent=0 // pred_region
    _
  $region37: #{newblock2_forward.2} parent=0 // pred_fallthru
    _
  // Predicated region
  $region38: #{newblock2_forward.2} parent=0 // pred_check
    _
  $region39: #{newblock2_forward.2} parent=0 // pred_check_branch
    %166 = sbr.rel (0) target = $region41
  $region40: #{newblock2_forward.2} parent=0 // pred_region
    _
  $region41: #{newblock2_forward.2} parent=0 // pred_fallthru
    _
  // Predicated region
  $region42: #{newblock2_forward.2} parent=0 // pred_check
    _
  $region43: #{newblock2_forward.2} parent=0 // pred_check_branch
    %168 = sbr.rel (0) target = $region45
  $region44: #{newblock2_forward.2} parent=0 // pred_region
    _
  $region45: #{newblock2_forward.2} parent=0 // pred_fallthru
    _
  // Predicated region
  $region46: #{newblock2_forward.2} parent=0 // pred_check
    _
  $region47: #{newblock2_forward.2} parent=0 // pred_check_branch
    %170 = sbr.rel (0) target = $region49
  $region48: #{newblock2_forward.2} parent=0 // pred_region
    _
  $region49: #{newblock2_forward.2} parent=0 // pred_fallthru
    _
  // Predicated region
  $region50: #{newblock2_forward.2} parent=0 // pred_check
    _
  $region51: #{newblock2_forward.2} parent=0 // pred_check_branch
    %172 = sbr.rel (0) target = $region53
  $region52: #{newblock2_forward.2} parent=0 // pred_region
    _
  $region53: #{newblock2_forward.2} parent=0 // pred_fallthru
    _

</llo_original>
